<compile_context>
chip_gen: v7x
topology: tpu7x:2x2x1
jax: 0.10.0
libtpu: 0.0.40
codegen_flags: <defaults>
</compile_context>

<pallas_src>
import functools

import jax
import jax.numpy as jnp
from jax.experimental import pallas as pl
from jax.experimental.pallas import tpu as pltpu


def _encoder_kernel(x_ref, w1_ref, b1_ref, w2_ref, b2_ref,
                    wc0_ref, wc1_ref, wc2_ref, bc_ref, o_ref, *, seq_len):
    # x_ref: (R, F_in) with R = bb * seq_len rows (batch-major, time-minor).
    x = x_ref[...].astype(jnp.bfloat16)

    # simple_encoder: Linear -> ReLU -> (Dropout = identity in eval) -> Linear
    h1 = jnp.dot(x, w1_ref[...], preferred_element_type=jnp.float32) + b1_ref[...]
    h1 = jnp.maximum(h1, 0.0)
    h = jnp.dot(h1.astype(jnp.bfloat16), w2_ref[...],
                preferred_element_type=jnp.float32) + b2_ref[...]
    # h: (R, D) f32 == simple_encoded

    R = h.shape[0]
    # Lane-invariant time index of each row within its sequence; jnp.where
    # broadcasts the (R, 1) mask over lanes (no full-width iota/compares).
    t_idx = jax.lax.broadcasted_iota(jnp.int32, (R, 1), 0) % seq_len

    # 3-tap temporal shifts via XLU sublane rotation; re-zero rows that wrapped
    # across sequence boundaries (== Conv1d zero padding at t=0 / t=T-1).
    # NOTE: correct only because every block holds whole sequences (R = bb*T),
    # so every block-edge row is also a t==0 / t==T-1 row.
    h_prev = jnp.where(t_idx == 0, 0.0, pltpu.roll(h, shift=1, axis=0))
    h_next = jnp.where(t_idx == seq_len - 1, 0.0,
                       pltpu.roll(h, shift=R - 1, axis=0))

    # Temporal conv as three accumulating K=D matmuls (bf16 in, f32 acc).
    conv = jnp.dot(h_prev.astype(jnp.bfloat16), wc0_ref[...],
                   preferred_element_type=jnp.float32)
    conv = conv + jnp.dot(h.astype(jnp.bfloat16), wc1_ref[...],
                          preferred_element_type=jnp.float32)
    conv = conv + jnp.dot(h_next.astype(jnp.bfloat16), wc2_ref[...],
                          preferred_element_type=jnp.float32)
    conv = conv + bc_ref[...]

    # Unpadded (rows, D) store: 4x fewer HBM bytes than the old 128-lane pad
    # and no post-kernel slice pass.
    o_ref[...] = h + conv


def _num_tensorcores():
    """Best-effort TensorCore-per-chip detection (v7x has 2, v5e/v6e have 1)."""
    try:
        d = jax.devices()[0]
        if d.platform != "tpu":
            return 1
        kind = d.device_kind.lower()
        if "v7" in kind or "7x" in kind:
            return 2
    except Exception:
        pass
    return 1


def _choose_block_batch(B, T, num_cores=1, target_rows=1024):
    """Batch elements per grid step.

    Single-TC (v5e/v6e): as few, as large blocks as possible (~target_rows).
    v7x: additionally force the grid length to a multiple of num_cores so the
    parallel axis shards across both TensorCores.  Blocks always contain whole
    sequences (rows = bb*T) -- required by the roll/mask conv trick.
    """
    divisors = [d for d in range(1, B + 1) if B % d == 0]
    fitting = [d for d in divisors if d * T <= target_rows] or [1]
    bb = max(fitting)
    if num_cores >= 2 and B >= num_cores:
        even = [d for d in fitting if (B // d) % num_cores == 0]
        if even:
            bb = max(even)
    return bb


def prepare_params(params):
    """One-time parameter packing (do NOT redo per forward call).

    Casts matmul weights to bf16, splits the conv taps into three (D, D)
    matrices, keeps biases in f32 (added after f32 accumulation).
    """
    w1, b1, w2, b2, wc, bc = params
    return (
        w1.astype(jnp.bfloat16),
        b1.reshape(1, -1).astype(jnp.float32),
        w2.astype(jnp.bfloat16),
        b2.reshape(1, -1).astype(jnp.float32),
        wc[0].astype(jnp.bfloat16),   # tap for h[t-1]
        wc[1].astype(jnp.bfloat16),   # tap for h[t]
        wc[2].astype(jnp.bfloat16),   # tap for h[t+1]
        bc.reshape(1, -1).astype(jnp.float32),
    )


def object_detection_encoder(x, packed_params, *, block_batch=None, num_cores=None):
    """x: (B, T, F_in) float32 -> (B, T, dim_feat) float32."""
    w1, b1, w2, b2, wc0, wc1, wc2, bc = packed_params
    B, T, F_in = x.shape
    D = w2.shape[1]

    if num_cores is None:
        num_cores = _num_tensorcores()
    bb = block_batch if block_batch is not None else _choose_block_batch(B, T, num_cores)
    # Each grid step must hold an integral number of whole sequences; otherwise
    # the roll-based conv would need explicit halo handling.
    assert B % bb == 0, "block_batch must divide the batch (whole sequences per block)"
    nb = B // bb
    rows = bb * T

    xf = x.reshape(B * T, F_in)

    out_flat = pl.pallas_call(
        functools.partial(_encoder_kernel, seq_len=T),
        out_shape=jax.ShapeDtypeStruct((B * T, D), jnp.float32),
        grid_spec=pl.GridSpec(
            grid=(nb,),
            in_specs=[
                pl.BlockSpec((rows, F_in), lambda i: (i, 0)),   # x rows
                pl.BlockSpec(w1.shape, lambda i: (0, 0)),       # W1  (F_in, 64) bf16
                pl.BlockSpec(b1.shape, lambda i: (0, 0)),       # b1  (1, 64)    f32
                pl.BlockSpec(w2.shape, lambda i: (0, 0)),       # W2  (64, D)    bf16
                pl.BlockSpec(b2.shape, lambda i: (0, 0)),       # b2  (1, D)     f32
                pl.BlockSpec(wc0.shape, lambda i: (0, 0)),      # conv tap 0 (D, D)
                pl.BlockSpec(wc1.shape, lambda i: (0, 0)),      # conv tap 1 (D, D)
                pl.BlockSpec(wc2.shape, lambda i: (0, 0)),      # conv tap 2 (D, D)
                pl.BlockSpec(bc.shape, lambda i: (0, 0)),       # conv bias  (1, D)
            ],
            out_specs=pl.BlockSpec((rows, D), lambda i: (i, 0)),
        ),
        compiler_params=pltpu.CompilerParams(dimension_semantics=("parallel",)),
    )(xf, w1, b1, w2, b2, wc0, wc1, wc2, bc)

    return out_flat.reshape(B, T, D)


def make_params(key, dim_feat, num_objects=4, features_per_object=5):
    """Deterministic synthetic parameters matching the PyTorch module's shapes."""
    f_in = num_objects * features_per_object
    ks = jax.random.split(key, 6)
    w1 = jax.random.normal(ks[0], (f_in, 64), jnp.float32) * 0.1
    b1 = jax.random.normal(ks[1], (1, 64), jnp.float32) * 0.1
    w2 = jax.random.normal(ks[2], (64, dim_feat), jnp.float32) * 0.1
    b2 = jax.random.normal(ks[3], (1, dim_feat), jnp.float32) * 0.1
    # PyTorch Conv1d weight is (C_out, C_in, K); here stored per-tap as
    # (K, C_in, C_out) so that tap k contributes  shift_k(h) @ wc[k].
    # (Porting a real checkpoint requires permuting: wc[k] = weight[:, :, k].T)
    wc = jax.random.normal(ks[4], (3, dim_feat, dim_feat), jnp.float32) * 0.1
    bc = jax.random.normal(ks[5], (1, dim_feat), jnp.float32) * 0.1
    return (w1, b1, w2, b2, wc, bc)


def reference_forward(x, params):
    """Pure-JAX f32 reference mirroring the PyTorch forward (eval mode)."""
    w1, b1, w2, b2, wc, bc = params
    h = jnp.maximum(x @ w1 + b1, 0.0) @ w2 + b2                    # (B, T, D)
    hp = jnp.pad(h, ((0, 0), (1, 1), (0, 0)))                      # zero pad time
    conv = hp[:, :-2] @ wc[0] + hp[:, 1:-1] @ wc[1] + hp[:, 2:] @ wc[2] + bc
    return h + conv


if __name__ == "__main__":
    B = 2
    T = 32                      # fixed by module docstring: (batch, 32, ...)
    NUM_OBJECTS = 4
    FEATS_PER_OBJECT = 5
    DIM_FEAT = 32

    key = jax.random.PRNGKey(0)
    k_x, k_p = jax.random.split(key)
    x = jax.random.normal(k_x, (B, T, NUM_OBJECTS * FEATS_PER_OBJECT), jnp.float32)
    params = make_params(k_p, DIM_FEAT, NUM_OBJECTS, FEATS_PER_OBJECT)
    packed = prepare_params(params)   # one-time weight packing / bf16 cast

    out = object_detection_encoder(x, packed)
    out = jax.block_until_ready(out)

    ref = reference_forward(x, params)
    assert out.shape == (B, T, DIM_FEAT)
    # bf16 matmul operands with f32 accumulation -> ~1e-2-level tolerance.
    max_err = float(jnp.max(jnp.abs(out - ref)))
    assert max_err < 5e-2, f"mismatch vs reference, max abs err = {max_err}"

    print("KERNEL_OK")
</pallas_src>

<mosaic_0001>
module attributes {stable_mosaic.version = 11 : i64} {
  func.func @_encoder_kernel(%arg0: i32, %arg1: memref<64x20xf32, #tpu.memory_space<vmem>>, %arg2: memref<20x64xbf16, #tpu.memory_space<vmem>>, %arg3: memref<1x64xf32, #tpu.memory_space<vmem>>, %arg4: memref<64x32xbf16, #tpu.memory_space<vmem>>, %arg5: memref<1x32xf32, #tpu.memory_space<vmem>>, %arg6: memref<32x32xbf16, #tpu.memory_space<vmem>>, %arg7: memref<32x32xbf16, #tpu.memory_space<vmem>>, %arg8: memref<32x32xbf16, #tpu.memory_space<vmem>>, %arg9: memref<1x32xf32, #tpu.memory_space<vmem>>, %arg10: memref<64x32xf32, #tpu.memory_space<vmem>>) attributes {dimension_semantics = [#tpu.dimension_semantics<parallel>], iteration_bounds = array<i64: 1>, scalar_prefetch = 0 : i64, scratch_operands = 0 : i64, tpu.core_type = #tpu.core_type<tc>, window_params = [{transform_indices = @transform_0, window_bounds = array<i64: 64, 20>}, {pipeline_mode = #tpu.pipeline_mode<synchronous>, transform_indices = @transform_1, window_bounds = array<i64: 20, 64>}, {pipeline_mode = #tpu.pipeline_mode<synchronous>, transform_indices = @transform_2, window_bounds = array<i64: 1, 64>}, {pipeline_mode = #tpu.pipeline_mode<synchronous>, transform_indices = @transform_3, window_bounds = array<i64: 64, 32>}, {pipeline_mode = #tpu.pipeline_mode<synchronous>, transform_indices = @transform_4, window_bounds = array<i64: 1, 32>}, {pipeline_mode = #tpu.pipeline_mode<synchronous>, transform_indices = @transform_5, window_bounds = array<i64: 32, 32>}, {pipeline_mode = #tpu.pipeline_mode<synchronous>, transform_indices = @transform_6, window_bounds = array<i64: 32, 32>}, {pipeline_mode = #tpu.pipeline_mode<synchronous>, transform_indices = @transform_7, window_bounds = array<i64: 32, 32>}, {pipeline_mode = #tpu.pipeline_mode<synchronous>, transform_indices = @transform_8, window_bounds = array<i64: 1, 32>}, {transform_indices = @transform_9, window_bounds = array<i64: 64, 32>}]} {
    %c0 = arith.constant 0 : index
    %c0_0 = arith.constant 0 : index
    %0 = vector.load %arg1[%c0, %c0_0] : memref<64x20xf32, #tpu.memory_space<vmem>>, vector<64x20xf32>
    %1 = arith.truncf %0 : vector<64x20xf32> to vector<64x20xbf16>
    %c0_1 = arith.constant 0 : index
    %c0_2 = arith.constant 0 : index
    %2 = vector.load %arg2[%c0_1, %c0_2] : memref<20x64xbf16, #tpu.memory_space<vmem>>, vector<20x64xbf16>
    %cst = arith.constant dense<0.000000e+00> : vector<64x64xf32>
    %3 = tpu.matmul %1, %2, %cst {dimension_numbers = #tpu.dot_dimension_numbers<[1], [0], [0], [1], [0, 0, 1, 1], [], []>} : vector<64x20xbf16>, vector<20x64xbf16>, vector<64x64xf32> -> vector<64x64xf32>
    %c0_3 = arith.constant 0 : index
    %c0_4 = arith.constant 0 : index
    %4 = vector.load %arg3[%c0_3, %c0_4] : memref<1x64xf32, #tpu.memory_space<vmem>>, vector<1x64xf32>
    %5 = vector.broadcast %4 : vector<1x64xf32> to vector<64x64xf32>
    %6 = arith.addf %3, %5 : vector<64x64xf32>
    %cst_5 = arith.constant 0.000000e+00 : f32
    %7 = vector.broadcast %cst_5 : f32 to vector<64x64xf32>
    %8 = arith.maximumf %6, %7 : vector<64x64xf32>
    %9 = arith.truncf %8 : vector<64x64xf32> to vector<64x64xbf16>
    %c0_6 = arith.constant 0 : index
    %c0_7 = arith.constant 0 : index
    %10 = vector.load %arg4[%c0_6, %c0_7] : memref<64x32xbf16, #tpu.memory_space<vmem>>, vector<64x32xbf16>
    %cst_8 = arith.constant dense<0.000000e+00> : vector<64x32xf32>
    %11 = tpu.matmul %9, %10, %cst_8 {dimension_numbers = #tpu.dot_dimension_numbers<[1], [0], [0], [1], [0, 0, 1, 1], [], []>} : vector<64x64xbf16>, vector<64x32xbf16>, vector<64x32xf32> -> vector<64x32xf32>
    %c0_9 = arith.constant 0 : index
    %c0_10 = arith.constant 0 : index
    %12 = vector.load %arg5[%c0_9, %c0_10] : memref<1x32xf32, #tpu.memory_space<vmem>>, vector<1x32xf32>
    %13 = vector.broadcast %12 : vector<1x32xf32> to vector<64x32xf32>
    %14 = arith.addf %11, %13 : vector<64x32xf32>
    %15 = tpu.iota {dimensions = array<i32: 0>} : vector<64x1xi32>
    %c32_i32 = arith.constant 32 : i32
    %c0_i32 = arith.constant 0 : i32
    %16 = arith.cmpi eq, %c32_i32, %c0_i32 : i32
    %c1_i32 = arith.constant 1 : i32
    %17 = arith.select %16, %c1_i32, %c32_i32 : i32
    %18 = vector.broadcast %17 : i32 to vector<64x1xi32>
    %19 = arith.remsi %15, %18 : vector<64x1xi32>
    %c0_i32_11 = arith.constant 0 : i32
    %20 = vector.broadcast %c0_i32_11 : i32 to vector<64x1xi32>
    %21 = arith.cmpi ne, %19, %20 : vector<64x1xi32>
    %c0_i32_12 = arith.constant 0 : i32
    %22 = vector.broadcast %c0_i32_12 : i32 to vector<64x1xi32>
    %23 = arith.cmpi slt, %19, %22 : vector<64x1xi32>
    %c0_i32_13 = arith.constant 0 : i32
    %24 = arith.cmpi slt, %17, %c0_i32_13 : i32
    %25 = vector.broadcast %24 : i1 to vector<64x1xi1>
    %26 = vector.broadcast %25 : vector<64x1xi1> to vector<64x1xi1>
    %27 = arith.xori %23, %26 : vector<64x1xi1>
    %28 = arith.andi %27, %21 : vector<64x1xi1>
    %29 = vector.broadcast %17 : i32 to vector<64x1xi32>
    %30 = arith.addi %19, %29 : vector<64x1xi32>
    %31 = arith.select %28, %30, %19 : vector<64x1xi1>, vector<64x1xi32>
    %c0_i32_14 = arith.constant 0 : i32
    %32 = vector.broadcast %c0_i32_14 : i32 to vector<64x1xi32>
    %33 = arith.cmpi eq, %31, %32 : vector<64x1xi32>
    %c1_i32_15 = arith.constant 1 : i32
    %34 = tpu.dynamic_rotate %14 by %c1_i32_15 dim 0 : vector<64x32xf32>, i32 -> vector<64x32xf32>
    %cst_16 = arith.constant 0.000000e+00 : f32
    %35 = vector.shape_cast %33 : vector<64x1xi1> to vector<64x1xi1>
    %36 = vector.broadcast %35 : vector<64x1xi1> to vector<64x32xi1>
    %37 = vector.broadcast %cst_16 : f32 to vector<64x32xf32>
    %38 = arith.select %36, %37, %34 : vector<64x32xi1>, vector<64x32xf32>
    %c31_i32 = arith.constant 31 : i32
    %39 = vector.broadcast %c31_i32 : i32 to vector<64x1xi32>
    %40 = arith.cmpi eq, %31, %39 : vector<64x1xi32>
    %c63_i32 = arith.constant 63 : i32
    %41 = tpu.dynamic_rotate %14 by %c63_i32 dim 0 : vector<64x32xf32>, i32 -> vector<64x32xf32>
    %cst_17 = arith.constant 0.000000e+00 : f32
    %42 = vector.shape_cast %40 : vector<64x1xi1> to vector<64x1xi1>
    %43 = vector.broadcast %42 : vector<64x1xi1> to vector<64x32xi1>
    %44 = vector.broadcast %cst_17 : f32 to vector<64x32xf32>
    %45 = arith.select %43, %44, %41 : vector<64x32xi1>, vector<64x32xf32>
    %46 = arith.truncf %38 : vector<64x32xf32> to vector<64x32xbf16>
    %c0_18 = arith.constant 0 : index
    %c0_19 = arith.constant 0 : index
    %47 = vector.load %arg6[%c0_18, %c0_19] : memref<32x32xbf16, #tpu.memory_space<vmem>>, vector<32x32xbf16>
    %cst_20 = arith.constant dense<0.000000e+00> : vector<64x32xf32>
    %48 = tpu.matmul %46, %47, %cst_20 {dimension_numbers = #tpu.dot_dimension_numbers<[1], [0], [0], [1], [0, 0, 1, 1], [], []>} : vector<64x32xbf16>, vector<32x32xbf16>, vector<64x32xf32> -> vector<64x32xf32>
    %49 = arith.truncf %14 : vector<64x32xf32> to vector<64x32xbf16>
    %c0_21 = arith.constant 0 : index
    %c0_22 = arith.constant 0 : index
    %50 = vector.load %arg7[%c0_21, %c0_22] : memref<32x32xbf16, #tpu.memory_space<vmem>>, vector<32x32xbf16>
    %cst_23 = arith.constant dense<0.000000e+00> : vector<64x32xf32>
    %51 = tpu.matmul %49, %50, %cst_23 {dimension_numbers = #tpu.dot_dimension_numbers<[1], [0], [0], [1], [0, 0, 1, 1], [], []>} : vector<64x32xbf16>, vector<32x32xbf16>, vector<64x32xf32> -> vector<64x32xf32>
    %52 = arith.addf %48, %51 : vector<64x32xf32>
    %53 = arith.truncf %45 : vector<64x32xf32> to vector<64x32xbf16>
    %c0_24 = arith.constant 0 : index
    %c0_25 = arith.constant 0 : index
    %54 = vector.load %arg8[%c0_24, %c0_25] : memref<32x32xbf16, #tpu.memory_space<vmem>>, vector<32x32xbf16>
    %cst_26 = arith.constant dense<0.000000e+00> : vector<64x32xf32>
    %55 = tpu.matmul %53, %54, %cst_26 {dimension_numbers = #tpu.dot_dimension_numbers<[1], [0], [0], [1], [0, 0, 1, 1], [], []>} : vector<64x32xbf16>, vector<32x32xbf16>, vector<64x32xf32> -> vector<64x32xf32>
    %56 = arith.addf %52, %55 : vector<64x32xf32>
    %c0_27 = arith.constant 0 : index
    %c0_28 = arith.constant 0 : index
    %57 = vector.load %arg9[%c0_27, %c0_28] : memref<1x32xf32, #tpu.memory_space<vmem>>, vector<1x32xf32>
    %58 = vector.broadcast %57 : vector<1x32xf32> to vector<64x32xf32>
    %59 = arith.addf %56, %58 : vector<64x32xf32>
    %60 = arith.addf %14, %59 : vector<64x32xf32>
    %c0_29 = arith.constant 0 : index
    %c0_30 = arith.constant 0 : index
    %61 = vector.load %arg10[%c0_29, %c0_30] : memref<64x32xf32, #tpu.memory_space<vmem>>, vector<64x32xf32>
    tpu.vector_store %arg10[%c0_29, %c0_30], %60 {strides = array<i32>} : memref<64x32xf32, #tpu.memory_space<vmem>>, vector<64x32xf32>,
    return
  }
  func.func @transform_0(%arg0: i32) -> (i32, i32) {
    %c0_i32 = arith.constant 0 : i32
    %c0_i32_0 = arith.constant 0 : i32
    return %arg0, %c0_i32 : i32, i32
  }
  func.func @transform_1(%arg0: i32) -> (i32, i32) {
    %c0_i32 = arith.constant 0 : i32
    %c0_i32_0 = arith.constant 0 : i32
    %c0_i32_1 = arith.constant 0 : i32
    return %c0_i32, %c0_i32_0 : i32, i32
  }
  func.func @transform_2(%arg0: i32) -> (i32, i32) {
    %c0_i32 = arith.constant 0 : i32
    %c0_i32_0 = arith.constant 0 : i32
    %c0_i32_1 = arith.constant 0 : i32
    return %c0_i32, %c0_i32_0 : i32, i32
  }
  func.func @transform_3(%arg0: i32) -> (i32, i32) {
    %c0_i32 = arith.constant 0 : i32
    %c0_i32_0 = arith.constant 0 : i32
    %c0_i32_1 = arith.constant 0 : i32
    return %c0_i32, %c0_i32_0 : i32, i32
  }
  func.func @transform_4(%arg0: i32) -> (i32, i32) {
    %c0_i32 = arith.constant 0 : i32
    %c0_i32_0 = arith.constant 0 : i32
    %c0_i32_1 = arith.constant 0 : i32
    return %c0_i32, %c0_i32_0 : i32, i32
  }
  func.func @transform_5(%arg0: i32) -> (i32, i32) {
    %c0_i32 = arith.constant 0 : i32
    %c0_i32_0 = arith.constant 0 : i32
    %c0_i32_1 = arith.constant 0 : i32
    return %c0_i32, %c0_i32_0 : i32, i32
  }
  func.func @transform_6(%arg0: i32) -> (i32, i32) {
    %c0_i32 = arith.constant 0 : i32
    %c0_i32_0 = arith.constant 0 : i32
    %c0_i32_1 = arith.constant 0 : i32
    return %c0_i32, %c0_i32_0 : i32, i32
  }
  func.func @transform_7(%arg0: i32) -> (i32, i32) {
    %c0_i32 = arith.constant 0 : i32
    %c0_i32_0 = arith.constant 0 : i32
    %c0_i32_1 = arith.constant 0 : i32
    return %c0_i32, %c0_i32_0 : i32, i32
  }
  func.func @transform_8(%arg0: i32) -> (i32, i32) {
    %c0_i32 = arith.constant 0 : i32
    %c0_i32_0 = arith.constant 0 : i32
    %c0_i32_1 = arith.constant 0 : i32
    return %c0_i32, %c0_i32_0 : i32, i32
  }
  func.func @transform_9(%arg0: i32) -> (i32, i32) {
    %c0_i32 = arith.constant 0 : i32
    %c0_i32_0 = arith.constant 0 : i32
    return %arg0, %c0_i32 : i32, i32
  }
}

</mosaic_0001>

<llo_original>
// kernel: tpu_custom_call.1
$region0: #{tpu_custom_call.1}
  #allocation0 [shape = 'u32[]', space=smem, size = 0x4, offset = 0x4, fixed_abs, tag = 'smem constant byte address 0x4 - core index']
  #allocation1 [shape = 'u32[144,128]{1,0:T(1,128)}', space=vmem, size = 0x12000, scoped, tag = 'internal scratch']
  %s0 = inlined_call_operand.vmem [shape: f32[64,20], index: 0, kind: input, shape index: {}]
  %s1 = inlined_call_operand.vmem [shape: bf16[20,64], index: 1, kind: input, shape index: {}]
  %s2 = inlined_call_operand.vmem [shape: f32[1,64], index: 2, kind: input, shape index: {}]
  %s3 = inlined_call_operand.vmem [shape: bf16[64,32], index: 3, kind: input, shape index: {}]
  %s4 = inlined_call_operand.vmem [shape: f32[1,32], index: 4, kind: input, shape index: {}]
  %s5 = inlined_call_operand.vmem [shape: bf16[32,32], index: 5, kind: input, shape index: {}]
  %s6 = inlined_call_operand.vmem [shape: bf16[32,32], index: 6, kind: input, shape index: {}]
  %s7 = inlined_call_operand.vmem [shape: bf16[32,32], index: 7, kind: input, shape index: {}]
  %s8 = inlined_call_operand.vmem [shape: f32[1,32], index: 8, kind: input, shape index: {}]
  %s9 = inlined_call_operand.vmem [shape: f32[64,32], index: 9, kind: output, shape index: {}]
  %s10 = sld [smem:[#allocation0]]
  $region46: #{tpu_custom_call.1} parent=0
    _
  %s12 = ssub.s32 1, %s10
  %s13 = scalar_select 0, %s12, %s10
  // Predicated region
  $region2: #{tpu_custom_call.1} parent=0 // pred_check
    _
  $region3: #{tpu_custom_call.1} parent=0 // pred_check_branch
    %15 = sbr.rel (0) target = $region5
  $region4: #{tpu_custom_call.1} parent=0 // pred_region
    _
  $region5: #{tpu_custom_call.1} parent=0 // pred_fallthru
    _
  // Predicated region
  $region6: #{tpu_custom_call.1} parent=0 // pred_check
    _
  $region7: #{tpu_custom_call.1} parent=0 // pred_check_branch
    %17 = sbr.rel (0) target = $region9
  $region8: #{tpu_custom_call.1} parent=0 // pred_region
    _
  $region9: #{tpu_custom_call.1} parent=0 // pred_fallthru
    _
  // Predicated region
  $region10: #{tpu_custom_call.1} parent=0 // pred_check
    _
  $region11: #{tpu_custom_call.1} parent=0 // pred_check_branch
    %19 = sbr.rel (0) target = $region13
  $region12: #{tpu_custom_call.1} parent=0 // pred_region
    _
  $region13: #{tpu_custom_call.1} parent=0 // pred_fallthru
    _
  // Predicated region
  $region14: #{tpu_custom_call.1} parent=0 // pred_check
    _
  $region15: #{tpu_custom_call.1} parent=0 // pred_check_branch
    %21 = sbr.rel (0) target = $region17
  $region16: #{tpu_custom_call.1} parent=0 // pred_region
    _
  $region17: #{tpu_custom_call.1} parent=0 // pred_fallthru
    _
  // Predicated region
  $region18: #{tpu_custom_call.1} parent=0 // pred_check
    _
  $region19: #{tpu_custom_call.1} parent=0 // pred_check_branch
    %23 = sbr.rel (0) target = $region21
  $region20: #{tpu_custom_call.1} parent=0 // pred_region
    _
  $region21: #{tpu_custom_call.1} parent=0 // pred_fallthru
    _
  // Predicated region
  $region22: #{tpu_custom_call.1} parent=0 // pred_check
    _
  $region23: #{tpu_custom_call.1} parent=0 // pred_check_branch
    %25 = sbr.rel (0) target = $region25
  $region24: #{tpu_custom_call.1} parent=0 // pred_region
    _
  $region25: #{tpu_custom_call.1} parent=0 // pred_fallthru
    _
  // Predicated region
  $region26: #{tpu_custom_call.1} parent=0 // pred_check
    _
  $region27: #{tpu_custom_call.1} parent=0 // pred_check_branch
    %27 = sbr.rel (0) target = $region29
  $region28: #{tpu_custom_call.1} parent=0 // pred_region
    _
  $region29: #{tpu_custom_call.1} parent=0 // pred_fallthru
    _
  // Predicated region
  $region30: #{tpu_custom_call.1} parent=0 // pred_check
    _
  $region31: #{tpu_custom_call.1} parent=0 // pred_check_branch
    %29 = sbr.rel (0) target = $region33
  $region32: #{tpu_custom_call.1} parent=0 // pred_region
    _
  $region33: #{tpu_custom_call.1} parent=0 // pred_fallthru
    _
  // Predicated region
  $region34: #{tpu_custom_call.1} parent=0 // pred_check
    _
  $region35: #{tpu_custom_call.1} parent=0 // pred_check_branch
    %31 = sbr.rel (0) target = $region37
  $region36: #{tpu_custom_call.1} parent=0 // pred_region
    _
  $region37: #{tpu_custom_call.1} parent=0 // pred_fallthru
    _
  %v33 = vld [vmem:[%s0] sm:$0xff]
  %v34 = vld [vmem:[%s0 + $0x8] sm:$0xff]
  %v35 = vld [vmem:[%s0 + $0x10] sm:$0xff]
  %v36 = vld [vmem:[%s0 + $0x18] sm:$0xff]
  %v37 = vld [vmem:[%s0 + $0x20] sm:$0xff]
  %v38 = vld [vmem:[%s0 + $0x28] sm:$0xff]
  %v39 = vld [vmem:[%s0 + $0x30] sm:$0xff]
  %v40 = vld [vmem:[%s0 + $0x38] sm:$0xff]
  %v41 = vpack.c.bf16 %v34, %v33
  %v42 = vpack.c.bf16 %v36, %v35
  %v43 = vpack.c.bf16 %v38, %v37
  %v44 = vpack.c.bf16 %v40, %v39
  %v45 = vld [vmem:[%s1] sm:$0xf]
  %v46 = vld [vmem:[%s1 + $0x4] sm:$0xf]
  %v47 = vld [vmem:[%s1 + $0x8] sm:$0x3]
  %v48 = vld [vmem:[%s2] sm:$0x1]
  %v50 = vlaneseq
  %v51 = vshrl.u32 %v50, 7
  %v52 = vsub.s32 0, %v51
  %v53 = vrot.slane %v48, %v52
  %v58 = vunpack.c.l.b16 %v45
  %v59 = vunpack.c.l.b16 %v46
  %v60 = vunpack.c.l.b16 %v47
  %v61 = vpack.c.b16 %v59, %v58
  %v62 = vpack.c.b16 %v60, %v60
  %vm64 = vcmask 162816
  %v66 = vsel %vm64, %v41, 0
  %v69 = vsel %vm64, %v42, 0
  %v72 = vsel %vm64, %v43, 0
  %v75 = vsel %vm64, %v44, 0
  %vm77 = vcmask 1041408
  %v79 = vsel %vm77, %v62, 0
  %81 = vmatprep.subr.bf16.mxu0 0
  %82 = vmatpush1.bf16.msra.mxu0 %v61
  %83 = vmatprep.subr.bf16.mxu0 0
  %84 = vmatpush1.bf16.msra.mxu0 %v79
  %85 = vmatprep.subr.bf16.mxu0 0
  %86 = vmatpush1.bf16.msra.mxu0 0
  %87 = vmatprep.subr.bf16.mxu0 0
  %88 = vmatpush1.bf16.msra.mxu0 0
  %89 = vmatprep.subr.bf16.mxu0 0
  %90 = vmatpush1.bf16.msra.mxu0 0
  %91 = vmatprep.subr.bf16.mxu0 0
  %92 = vmatpush1.bf16.msra.mxu0 0
  %93 = vmatprep.subr.bf16.mxu0 0
  %94 = vmatpush1.bf16.msra.mxu0 0
  %95 = vmatprep.subr.bf16.mxu0 0
  %96 = vmatpush1.bf16.msra.mxu0 0
  %97 = vmatprep.subr.bf16.mxu0 0
  %98 = vmatpush1.bf16.msra.mxu0 0
  %99 = vmatprep.subr.bf16.mxu0 0
  %100 = vmatpush1.bf16.msra.mxu0 0
  %101 = vmatprep.subr.bf16.mxu0 0
  %102 = vmatpush1.bf16.msra.mxu0 0
  %103 = vmatprep.subr.bf16.mxu0 0
  %104 = vmatpush1.bf16.msra.mxu0 0
  %105 = vmatprep.subr.bf16.mxu0 0
  %106 = vmatpush1.bf16.msra.mxu0 0
  %107 = vmatprep.subr.bf16.mxu0 0
  %108 = vmatpush1.bf16.msra.mxu0 0
  %109 = vmatprep.subr.bf16.mxu0 0
  %110 = vmatpush1.bf16.msra.mxu0 0
  %111 = vmatprep.subr.bf16.mxu0 0
  %112 = vmatpush1.bf16.msra.mxu0 0
  %113 = vmatprep.mubr.bf16.mxu0 0
  %114 = vmatmul.mubr.bf16.gmra.mrb[0].mxu0 %v66
  %v115 = vpop.f32.mrb[0].mxu0
  %v116 = vadd.f32 %v53, %v115
  %v117 = vpop.f32.mrb[0].mxu0
  %v118 = vpop.f32.mrb[0].mxu0
  %v119 = vadd.f32 %v53, %v118
  %v120 = vpop.f32.mrb[0].mxu0
  %121 = vmatprep.mubr.bf16.mxu0 0
  %122 = vmatmul.mubr.bf16.gmra.mrb[0].mxu0 %v69
  %v123 = vpop.f32.mrb[0].mxu0
  %v124 = vadd.f32 %v53, %v123
  %v125 = vpop.f32.mrb[0].mxu0
  %v126 = vpop.f32.mrb[0].mxu0
  %v127 = vadd.f32 %v53, %v126
  %v128 = vpop.f32.mrb[0].mxu0
  %129 = vmatprep.mubr.bf16.mxu0 0
  %130 = vmatmul.mubr.bf16.gmra.mrb[0].mxu0 %v72
  %v131 = vpop.f32.mrb[0].mxu0
  %v132 = vadd.f32 %v53, %v131
  %v133 = vpop.f32.mrb[0].mxu0
  %v134 = vpop.f32.mrb[0].mxu0
  %v135 = vadd.f32 %v53, %v134
  %v136 = vpop.f32.mrb[0].mxu0
  %137 = vmatprep.mubr.bf16.mxu0 0
  %138 = vmatmul.mubr.bf16.gmra.mrb[0].mxu0 %v75
  %v139 = vpop.f32.mrb[0].mxu0
  %v140 = vadd.f32 %v53, %v139
  %v141 = vpop.f32.mrb[0].mxu0
  %v142 = vpop.f32.mrb[0].mxu0
  %v143 = vadd.f32 %v53, %v142
  %v144 = vpop.f32.mrb[0].mxu0
  %145 = vdwg.mxu0
  %v146 = vmax.f32 %v116, 0.0
  %v147 = vmax.f32 %v119, 0.0
  %v148 = vmax.f32 %v124, 0.0
  %v149 = vmax.f32 %v127, 0.0
  %v150 = vmax.f32 %v132, 0.0
  %v151 = vmax.f32 %v135, 0.0
  %v152 = vmax.f32 %v140, 0.0
  %v153 = vmax.f32 %v143, 0.0
  %v154 = vpack.c.bf16 %v147, %v146
  %v155 = vpack.c.bf16 %v149, %v148
  %v156 = vpack.c.bf16 %v151, %v150
  %v157 = vpack.c.bf16 %v153, %v152
  %v158 = vld [vmem:[%s3] sm:$0xf]
  %v159 = vld [vmem:[%s3 + $0x4] sm:$0xf]
  %v160 = vld [vmem:[%s3 + $0x8] sm:$0xf]
  %v161 = vld [vmem:[%s3 + $0xc] sm:$0xf]
  %v162 = vld [vmem:[%s3 + $0x10] sm:$0xf]
  %v163 = vld [vmem:[%s3 + $0x14] sm:$0xf]
  %v164 = vld [vmem:[%s3 + $0x18] sm:$0xf]
  %v165 = vld [vmem:[%s3 + $0x1c] sm:$0xf]
  %v166 = vld [vmem:[%s4] sm:$0x1]
  %v168 = vlaneseq
  %v169 = vshrl.u32 %v168, 7
  %v170 = vsub.s32 0, %v169
  %v171 = vrot.slane %v166, %v170
  %v181 = vunpack.c.l.b16 %v158
  %v182 = vunpack.c.l.b16 %v159
  %v183 = vunpack.c.l.b16 %v160
  %v184 = vunpack.c.l.b16 %v161
  %v185 = vunpack.c.l.b16 %v162
  %v186 = vunpack.c.l.b16 %v163
  %v187 = vunpack.c.l.b16 %v164
  %v188 = vunpack.c.l.b16 %v165
  %v189 = vpack.c.b16 %v182, %v181
  %v190 = vpack.c.b16 %v184, %v183
  %v191 = vpack.c.b16 %v186, %v185
  %v192 = vpack.c.b16 %v188, %v187
  %vm197 = vcmask 523264
  %v199 = vsel %vm197, %v154, 0
  %v202 = vsel %vm197, %v155, 0
  %v205 = vsel %vm197, %v156, 0
  %v208 = vsel %vm197, %v157, 0
  %210 = vmatprep.subr.bf16.mxu0 0
  %211 = vmatpush1.bf16.msra.mxu0 %v189
  %212 = vmatprep.subr.bf16.mxu0 0
  %213 = vmatpush1.bf16.msra.mxu0 %v190
  %214 = vmatprep.subr.bf16.mxu0 0
  %215 = vmatpush1.bf16.msra.mxu0 %v191
  %216 = vmatprep.subr.bf16.mxu0 0
  %217 = vmatpush1.bf16.msra.mxu0 %v192
  %218 = vmatprep.subr.bf16.mxu0 0
  %219 = vmatpush1.bf16.msra.mxu0 0
  %220 = vmatprep.subr.bf16.mxu0 0
  %221 = vmatpush1.bf16.msra.mxu0 0
  %222 = vmatprep.subr.bf16.mxu0 0
  %223 = vmatpush1.bf16.msra.mxu0 0
  %224 = vmatprep.subr.bf16.mxu0 0
  %225 = vmatpush1.bf16.msra.mxu0 0
  %226 = vmatprep.subr.bf16.mxu0 0
  %227 = vmatpush1.bf16.msra.mxu0 0
  %228 = vmatprep.subr.bf16.mxu0 0
  %229 = vmatpush1.bf16.msra.mxu0 0
  %230 = vmatprep.subr.bf16.mxu0 0
  %231 = vmatpush1.bf16.msra.mxu0 0
  %232 = vmatprep.subr.bf16.mxu0 0
  %233 = vmatpush1.bf16.msra.mxu0 0
  %234 = vmatprep.subr.bf16.mxu0 0
  %235 = vmatpush1.bf16.msra.mxu0 0
  %236 = vmatprep.subr.bf16.mxu0 0
  %237 = vmatpush1.bf16.msra.mxu0 0
  %238 = vmatprep.subr.bf16.mxu0 0
  %239 = vmatpush1.bf16.msra.mxu0 0
  %240 = vmatprep.subr.bf16.mxu0 0
  %241 = vmatpush1.bf16.msra.mxu0 0
  %242 = vmatprep.mubr.bf16.mxu0 0
  %243 = vmatmul.mubr.bf16.gmra.mrb[0].mxu0 %v199
  %v244 = vpop.f32.mrb[0].mxu0
  %v245 = vadd.f32 %v171, %v244
  %v246 = vpop.f32.mrb[0].mxu0
  %v247 = vpop.f32.mrb[0].mxu0
  %v248 = vadd.f32 %v171, %v247
  %v249 = vpop.f32.mrb[0].mxu0
  %250 = vmatprep.mubr.bf16.mxu0 0
  %251 = vmatmul.mubr.bf16.gmra.mrb[0].mxu0 %v202
  %v252 = vpop.f32.mrb[0].mxu0
  %v253 = vadd.f32 %v171, %v252
  %v254 = vpop.f32.mrb[0].mxu0
  %v255 = vpop.f32.mrb[0].mxu0
  %v256 = vadd.f32 %v171, %v255
  %v257 = vpop.f32.mrb[0].mxu0
  %258 = vmatprep.mubr.bf16.mxu0 0
  %259 = vmatmul.mubr.bf16.gmra.mrb[0].mxu0 %v205
  %v260 = vpop.f32.mrb[0].mxu0
  %v261 = vadd.f32 %v171, %v260
  %v262 = vpop.f32.mrb[0].mxu0
  %v263 = vpop.f32.mrb[0].mxu0
  %v264 = vadd.f32 %v171, %v263
  %v265 = vpop.f32.mrb[0].mxu0
  %266 = vmatprep.mubr.bf16.mxu0 0
  %267 = vmatmul.mubr.bf16.gmra.mrb[0].mxu0 %v208
  %v268 = vpop.f32.mrb[0].mxu0
  %v269 = vadd.f32 %v171, %v268
  %v270 = vpop.f32.mrb[0].mxu0
  %v271 = vpop.f32.mrb[0].mxu0
  %v272 = vadd.f32 %v171, %v271
  %v273 = vpop.f32.mrb[0].mxu0
  %274 = vdwg.mxu0
  %v275 = vlaneseq
  %v276 = vshrl.u32 %v275, 7
  %v277 = vadd.s32 %v276, 8
  %v278 = vadd.s32 %v276, 16
  %v279 = vadd.s32 %v276, 24
  %v280 = vadd.s32 %v276, 32
  %v281 = vadd.s32 %v276, 40
  %v282 = vadd.s32 %v276, 48
  %v283 = vadd.s32 %v276, 56
  %vm284 = vcmp.lt.s32.totalorder %v276, 0
  %v285 = vsub.s32 0, %v276
  %v286 = vsel %vm284, %v285, %v276
  %v287 = vshrl.u32 %v286, 5
  %v288 = vand.u32 %v286, 31
  %v289 = vsub.s32 0, %v288
  %v290 = vsel %vm284, %v289, %v288
  %vm291 = vcmp.lt.s32.totalorder %v277, 0
  %v292 = vsub.s32 0, %v277
  %v293 = vsel %vm291, %v292, %v277
  %v294 = vshrl.u32 %v293, 5
  %v295 = vand.u32 %v293, 31
  %v296 = vsub.s32 0, %v295
  %v297 = vsel %vm291, %v296, %v295
  %vm298 = vcmp.lt.s32.totalorder %v278, 0
  %v299 = vsub.s32 0, %v278
  %v300 = vsel %vm298, %v299, %v278
  %v301 = vshrl.u32 %v300, 5
  %v302 = vand.u32 %v300, 31
  %v303 = vsub.s32 0, %v302
  %v304 = vsel %vm298, %v303, %v302
  %vm305 = vcmp.lt.s32.totalorder %v279, 0
  %v306 = vsub.s32 0, %v279
  %v307 = vsel %vm305, %v306, %v279
  %v308 = vshrl.u32 %v307, 5
  %v309 = vand.u32 %v307, 31
  %v310 = vsub.s32 0, %v309
  %v311 = vsel %vm305, %v310, %v309
  %vm312 = vcmp.lt.s32.totalorder %v280, 0
  %v313 = vsub.s32 0, %v280
  %v314 = vsel %vm312, %v313, %v280
  %v315 = vshrl.u32 %v314, 5
  %v316 = vand.u32 %v314, 31
  %v317 = vsub.s32 0, %v316
  %v318 = vsel %vm312, %v317, %v316
  %vm319 = vcmp.lt.s32.totalorder %v281, 0
  %v320 = vsub.s32 0, %v281
  %v321 = vsel %vm319, %v320, %v281
  %v322 = vshrl.u32 %v321, 5
  %v323 = vand.u32 %v321, 31
  %v324 = vsub.s32 0, %v323
  %v325 = vsel %vm319, %v324, %v323
  %vm326 = vcmp.lt.s32.totalorder %v282, 0
  %v327 = vsub.s32 0, %v282
  %v328 = vsel %vm326, %v327, %v282
  %v329 = vshrl.u32 %v328, 5
  %v330 = vand.u32 %v328, 31
  %v331 = vsub.s32 0, %v330
  %v332 = vsel %vm326, %v331, %v330
  %vm333 = vcmp.lt.s32.totalorder %v283, 0
  %v334 = vsub.s32 0, %v283
  %v335 = vsel %vm333, %v334, %v283
  %v336 = vshrl.u32 %v335, 5
  %v337 = vand.u32 %v335, 31
  %v338 = vsub.s32 0, %v337
  %v339 = vsel %vm333, %v338, %v337
  %vm340 = vcmp.ne.s32.totalorder %v290, 0
  %vm341 = vcmp.ne.s32.totalorder %v297, 0
  %vm342 = vcmp.ne.s32.totalorder %v304, 0
  %vm343 = vcmp.ne.s32.totalorder %v311, 0
  %vm344 = vcmp.ne.s32.totalorder %v318, 0
  %vm345 = vcmp.ne.s32.totalorder %v325, 0
  %vm346 = vcmp.ne.s32.totalorder %v332, 0
  %vm347 = vcmp.ne.s32.totalorder %v339, 0
  %vm348 = vcmp.lt.s32.totalorder %v290, 0
  %vm349 = vcmp.lt.s32.totalorder %v297, 0
  %vm350 = vcmp.lt.s32.totalorder %v304, 0
  %vm351 = vcmp.lt.s32.totalorder %v311, 0
  %vm352 = vcmp.lt.s32.totalorder %v318, 0
  %vm353 = vcmp.lt.s32.totalorder %v325, 0
  %vm354 = vcmp.lt.s32.totalorder %v332, 0
  %vm355 = vcmp.lt.s32.totalorder %v339, 0
  %vm356 = vmand %vm348, %vm340
  %vm357 = vmand %vm349, %vm341
  %vm358 = vmand %vm350, %vm342
  %vm359 = vmand %vm351, %vm343
  %vm360 = vmand %vm352, %vm344
  %vm361 = vmand %vm353, %vm345
  %vm362 = vmand %vm354, %vm346
  %vm363 = vmand %vm355, %vm347
  %v364 = vadd.s32 %v290, 32
  %v365 = vadd.s32 %v297, 32
  %v366 = vadd.s32 %v304, 32
  %v367 = vadd.s32 %v311, 32
  %v368 = vadd.s32 %v318, 32
  %v369 = vadd.s32 %v325, 32
  %v370 = vadd.s32 %v332, 32
  %v371 = vadd.s32 %v339, 32
  %v372 = vsel %vm356, %v364, %v290
  %v373 = vsel %vm357, %v365, %v297
  %v374 = vsel %vm358, %v366, %v304
  %v375 = vsel %vm359, %v367, %v311
  %v376 = vsel %vm360, %v368, %v318
  %v377 = vsel %vm361, %v369, %v325
  %v378 = vsel %vm362, %v370, %v332
  %v379 = vsel %vm363, %v371, %v339
  %vm380 = vcmp.eq.s32.totalorder %v372, 0
  %vm381 = vcmp.eq.s32.totalorder %v373, 0
  %vm382 = vcmp.eq.s32.totalorder %v374, 0
  %vm383 = vcmp.eq.s32.totalorder %v375, 0
  %vm384 = vcmp.eq.s32.totalorder %v376, 0
  %vm385 = vcmp.eq.s32.totalorder %v377, 0
  %vm386 = vcmp.eq.s32.totalorder %v378, 0
  %vm387 = vcmp.eq.s32.totalorder %v379, 0
  %v388 = vrot.slane %v245, 7
  %v389 = vrot.slane %v248, 7
  %v390 = vrot.slane %v253, 7
  %v391 = vrot.slane %v256, 7
  %v392 = vrot.slane %v261, 7
  %v393 = vrot.slane %v264, 7
  %v394 = vrot.slane %v269, 7
  %v395 = vrot.slane %v272, 7
  %vm396 = vcmp.lt.s32.totalorder %v276, 1
  %v397 = vsel %vm396, %v394, %v395
  %v398 = vsel %vm396, %v393, %v394
  %v399 = vsel %vm396, %v392, %v393
  %v400 = vsel %vm396, %v391, %v392
  %v401 = vsel %vm396, %v390, %v391
  %v402 = vsel %vm396, %v389, %v390
  %v403 = vsel %vm396, %v388, %v389
  %v404 = vsel %vm396, %v395, %v388
  %v405 = vsel %vm380, 1, 0
  %v406 = vsel %vm381, 1, 0
  %v407 = vsel %vm382, 1, 0
  %v408 = vsel %vm383, 1, 0
  %v409 = vsel %vm384, 1, 0
  %v410 = vsel %vm385, 1, 0
  %v411 = vsel %vm386, 1, 0
  %v412 = vsel %vm387, 1, 0
  %vm413 = vcmp.eq.s32.totalorder %v405, 1
  %vm414 = vcmp.eq.s32.totalorder %v406, 1
  %vm415 = vcmp.eq.s32.totalorder %v407, 1
  %vm416 = vcmp.eq.s32.totalorder %v408, 1
  %vm417 = vcmp.eq.s32.totalorder %v409, 1
  %vm418 = vcmp.eq.s32.totalorder %v410, 1
  %vm419 = vcmp.eq.s32.totalorder %v411, 1
  %vm420 = vcmp.eq.s32.totalorder %v412, 1
  %v421 = vsel %vm413, 0.0, %v404
  %v422 = vsel %vm414, 0.0, %v403
  %v423 = vsel %vm415, 0.0, %v402
  %v424 = vsel %vm416, 0.0, %v401
  %v425 = vsel %vm417, 0.0, %v400
  %v426 = vsel %vm418, 0.0, %v399
  %v427 = vsel %vm419, 0.0, %v398
  %v428 = vsel %vm420, 0.0, %v397
  %vm429 = vcmp.eq.s32.totalorder %v372, 31
  %vm430 = vcmp.eq.s32.totalorder %v373, 31
  %vm431 = vcmp.eq.s32.totalorder %v374, 31
  %vm432 = vcmp.eq.s32.totalorder %v375, 31
  %vm433 = vcmp.eq.s32.totalorder %v376, 31
  %vm434 = vcmp.eq.s32.totalorder %v377, 31
  %vm435 = vcmp.eq.s32.totalorder %v378, 31
  %vm436 = vcmp.eq.s32.totalorder %v379, 31
  %v437 = vrot.slane %v245, 1
  %v438 = vrot.slane %v248, 1
  %v439 = vrot.slane %v253, 1
  %v440 = vrot.slane %v256, 1
  %v441 = vrot.slane %v261, 1
  %v442 = vrot.slane %v264, 1
  %v443 = vrot.slane %v269, 1
  %v444 = vrot.slane %v272, 1
  %vm445 = vcmp.lt.s32.totalorder %v276, 7
  %v446 = vsel %vm445, %v443, %v444
  %v447 = vsel %vm445, %v442, %v443
  %v448 = vsel %vm445, %v441, %v442
  %v449 = vsel %vm445, %v440, %v441
  %v450 = vsel %vm445, %v439, %v440
  %v451 = vsel %vm445, %v438, %v439
  %v452 = vsel %vm445, %v437, %v438
  %v453 = vsel %vm445, %v444, %v437
  %v454 = vsel %vm429, 1, 0
  %v455 = vsel %vm430, 1, 0
  %v456 = vsel %vm431, 1, 0
  %v457 = vsel %vm432, 1, 0
  %v458 = vsel %vm433, 1, 0
  %v459 = vsel %vm434, 1, 0
  %v460 = vsel %vm435, 1, 0
  %v461 = vsel %vm436, 1, 0
  %vm462 = vcmp.eq.s32.totalorder %v454, 1
  %vm463 = vcmp.eq.s32.totalorder %v455, 1
  %vm464 = vcmp.eq.s32.totalorder %v456, 1
  %vm465 = vcmp.eq.s32.totalorder %v457, 1
  %vm466 = vcmp.eq.s32.totalorder %v458, 1
  %vm467 = vcmp.eq.s32.totalorder %v459, 1
  %vm468 = vcmp.eq.s32.totalorder %v460, 1
  %vm469 = vcmp.eq.s32.totalorder %v461, 1
  %v470 = vsel %vm462, 0.0, %v452
  %v471 = vsel %vm463, 0.0, %v451
  %v472 = vsel %vm464, 0.0, %v450
  %v473 = vsel %vm465, 0.0, %v449
  %v474 = vsel %vm466, 0.0, %v448
  %v475 = vsel %vm467, 0.0, %v447
  %v476 = vsel %vm468, 0.0, %v446
  %v477 = vsel %vm469, 0.0, %v453
  %v478 = vpack.c.bf16 %v422, %v421
  %v479 = vpack.c.bf16 %v424, %v423
  %v480 = vpack.c.bf16 %v426, %v425
  %v481 = vpack.c.bf16 %v428, %v427
  %v482 = vld [vmem:[%s5] sm:$0xf]
  %v483 = vld [vmem:[%s5 + $0x4] sm:$0xf]
  %v484 = vld [vmem:[%s5 + $0x8] sm:$0xf]
  %v485 = vld [vmem:[%s5 + $0xc] sm:$0xf]
  %v486 = vpack.c.bf16 %v248, %v245
  %v487 = vpack.c.bf16 %v256, %v253
  %v488 = vpack.c.bf16 %v264, %v261
  %v489 = vpack.c.bf16 %v272, %v269
  %v490 = vld [vmem:[%s6] sm:$0xf]
  %v491 = vld [vmem:[%s6 + $0x4] sm:$0xf]
  %v492 = vld [vmem:[%s6 + $0x8] sm:$0xf]
  %v493 = vld [vmem:[%s6 + $0xc] sm:$0xf]
  %v498 = vunpack.c.l.b16 %v490
  %v499 = vunpack.c.l.b16 %v491
  %v500 = vunpack.c.l.b16 %v492
  %v501 = vunpack.c.l.b16 %v493
  %v502 = vpack.c.b16 %v499, %v498
  %v503 = vpack.c.b16 %v501, %v500
  %vm506 = vcmask 261120
  %v508 = vsel %vm506, %v486, 0
  %v511 = vsel %vm506, %v487, 0
  %v514 = vsel %vm506, %v488, 0
  %v517 = vsel %vm506, %v489, 0
  %519 = vmatprep.subr.bf16.mxu0 0
  %520 = vmatpush1.bf16.msra.mxu0 %v502
  %521 = vmatprep.subr.bf16.mxu0 0
  %522 = vmatpush1.bf16.msra.mxu0 %v503
  %523 = vmatprep.subr.bf16.mxu0 0
  %524 = vmatpush1.bf16.msra.mxu0 0
  %525 = vmatprep.subr.bf16.mxu0 0
  %526 = vmatpush1.bf16.msra.mxu0 0
  %527 = vmatprep.subr.bf16.mxu0 0
  %528 = vmatpush1.bf16.msra.mxu0 0
  %529 = vmatprep.subr.bf16.mxu0 0
  %530 = vmatpush1.bf16.msra.mxu0 0
  %531 = vmatprep.subr.bf16.mxu0 0
  %532 = vmatpush1.bf16.msra.mxu0 0
  %533 = vmatprep.subr.bf16.mxu0 0
  %534 = vmatpush1.bf16.msra.mxu0 0
  %535 = vmatprep.subr.bf16.mxu0 0
  %536 = vmatpush1.bf16.msra.mxu0 0
  %537 = vmatprep.subr.bf16.mxu0 0
  %538 = vmatpush1.bf16.msra.mxu0 0
  %539 = vmatprep.subr.bf16.mxu0 0
  %540 = vmatpush1.bf16.msra.mxu0 0
  %541 = vmatprep.subr.bf16.mxu0 0
  %542 = vmatpush1.bf16.msra.mxu0 0
  %543 = vmatprep.subr.bf16.mxu0 0
  %544 = vmatpush1.bf16.msra.mxu0 0
  %545 = vmatprep.subr.bf16.mxu0 0
  %546 = vmatpush1.bf16.msra.mxu0 0
  %547 = vmatprep.subr.bf16.mxu0 0
  %548 = vmatpush1.bf16.msra.mxu0 0
  %549 = vmatprep.subr.bf16.mxu0 0
  %550 = vmatpush1.bf16.msra.mxu0 0
  %551 = vmatprep.mubr.bf16.mxu0 0
  %552 = vmatmul.mubr.bf16.gmra.mrb[0].mxu0 %v508
  %v553 = vpop.f32.mrb[0].mxu0
  %v554 = vadd.f32 0.0, %v553
  %v555 = vpop.f32.mrb[0].mxu0
  %v556 = vpop.f32.mrb[0].mxu0
  %v557 = vadd.f32 0.0, %v556
  %v558 = vpop.f32.mrb[0].mxu0
  %559 = vmatprep.mubr.bf16.mxu0 0
  %560 = vmatmul.mubr.bf16.gmra.mrb[0].mxu0 %v511
  %v561 = vpop.f32.mrb[0].mxu0
  %v562 = vadd.f32 0.0, %v561
  %v563 = vpop.f32.mrb[0].mxu0
  %v564 = vpop.f32.mrb[0].mxu0
  %v565 = vadd.f32 0.0, %v564
  %v566 = vpop.f32.mrb[0].mxu0
  %567 = vmatprep.mubr.bf16.mxu0 0
  %568 = vmatmul.mubr.bf16.gmra.mrb[0].mxu0 %v514
  %v569 = vpop.f32.mrb[0].mxu0
  %v570 = vadd.f32 0.0, %v569
  %v571 = vpop.f32.mrb[0].mxu0
  %v572 = vpop.f32.mrb[0].mxu0
  %v573 = vadd.f32 0.0, %v572
  %v574 = vpop.f32.mrb[0].mxu0
  %575 = vmatprep.mubr.bf16.mxu0 0
  %576 = vmatmul.mubr.bf16.gmra.mrb[0].mxu0 %v517
  %v577 = vpop.f32.mrb[0].mxu0
  %v578 = vadd.f32 0.0, %v577
  %v579 = vpop.f32.mrb[0].mxu0
  %v580 = vpop.f32.mrb[0].mxu0
  %v581 = vadd.f32 0.0, %v580
  %v582 = vpop.f32.mrb[0].mxu0
  %583 = vdwg.mxu0
  %v588 = vunpack.c.l.b16 %v482
  %v589 = vunpack.c.l.b16 %v483
  %v590 = vunpack.c.l.b16 %v484
  %v591 = vunpack.c.l.b16 %v485
  %v592 = vpack.c.b16 %v589, %v588
  %v593 = vpack.c.b16 %v591, %v590
  %v597 = vsel %vm506, %v478, 0
  %v600 = vsel %vm506, %v479, 0
  %v603 = vsel %vm506, %v480, 0
  %v606 = vsel %vm506, %v481, 0
  %608 = vmatprep.subr.bf16.mxu0 0
  %609 = vmatpush1.bf16.msra.mxu0 %v592
  %610 = vmatprep.subr.bf16.mxu0 0
  %611 = vmatpush1.bf16.msra.mxu0 %v593
  %612 = vmatprep.subr.bf16.mxu0 0
  %613 = vmatpush1.bf16.msra.mxu0 0
  %614 = vmatprep.subr.bf16.mxu0 0
  %615 = vmatpush1.bf16.msra.mxu0 0
  %616 = vmatprep.subr.bf16.mxu0 0
  %617 = vmatpush1.bf16.msra.mxu0 0
  %618 = vmatprep.subr.bf16.mxu0 0
  %619 = vmatpush1.bf16.msra.mxu0 0
  %620 = vmatprep.subr.bf16.mxu0 0
  %621 = vmatpush1.bf16.msra.mxu0 0
  %622 = vmatprep.subr.bf16.mxu0 0
  %623 = vmatpush1.bf16.msra.mxu0 0
  %624 = vmatprep.subr.bf16.mxu0 0
  %625 = vmatpush1.bf16.msra.mxu0 0
  %626 = vmatprep.subr.bf16.mxu0 0
  %627 = vmatpush1.bf16.msra.mxu0 0
  %628 = vmatprep.subr.bf16.mxu0 0
  %629 = vmatpush1.bf16.msra.mxu0 0
  %630 = vmatprep.subr.bf16.mxu0 0
  %631 = vmatpush1.bf16.msra.mxu0 0
  %632 = vmatprep.subr.bf16.mxu0 0
  %633 = vmatpush1.bf16.msra.mxu0 0
  %634 = vmatprep.subr.bf16.mxu0 0
  %635 = vmatpush1.bf16.msra.mxu0 0
  %636 = vmatprep.subr.bf16.mxu0 0
  %637 = vmatpush1.bf16.msra.mxu0 0
  %638 = vmatprep.subr.bf16.mxu0 0
  %639 = vmatpush1.bf16.msra.mxu0 0
  %640 = vmatprep.mubr.bf16.mxu0 0
  %641 = vmatmul.mubr.bf16.gmra.mrb[0].mxu0 %v597
  %v642 = vpop.f32.mrb[0].mxu0
  %v643 = vadd.f32 %v554, %v642
  %v644 = vpop.f32.mrb[0].mxu0
  %v645 = vpop.f32.mrb[0].mxu0
  %v646 = vadd.f32 %v557, %v645
  %v647 = vpop.f32.mrb[0].mxu0
  %648 = vmatprep.mubr.bf16.mxu0 0
  %649 = vmatmul.mubr.bf16.gmra.mrb[0].mxu0 %v600
  %v650 = vpop.f32.mrb[0].mxu0
  %v651 = vadd.f32 %v562, %v650
  %v652 = vpop.f32.mrb[0].mxu0
  %v653 = vpop.f32.mrb[0].mxu0
  %v654 = vadd.f32 %v565, %v653
  %v655 = vpop.f32.mrb[0].mxu0
  %656 = vmatprep.mubr.bf16.mxu0 0
  %657 = vmatmul.mubr.bf16.gmra.mrb[0].mxu0 %v603
  %v658 = vpop.f32.mrb[0].mxu0
  %v659 = vadd.f32 %v570, %v658
  %v660 = vpop.f32.mrb[0].mxu0
  %v661 = vpop.f32.mrb[0].mxu0
  %v662 = vadd.f32 %v573, %v661
  %v663 = vpop.f32.mrb[0].mxu0
  %664 = vmatprep.mubr.bf16.mxu0 0
  %665 = vmatmul.mubr.bf16.gmra.mrb[0].mxu0 %v606
  %v666 = vpop.f32.mrb[0].mxu0
  %v667 = vadd.f32 %v578, %v666
  %v668 = vpop.f32.mrb[0].mxu0
  %v669 = vpop.f32.mrb[0].mxu0
  %v670 = vadd.f32 %v581, %v669
  %v671 = vpop.f32.mrb[0].mxu0
  %672 = vdwg.mxu0
  %v673 = vpack.c.bf16 %v471, %v470
  %v674 = vpack.c.bf16 %v473, %v472
  %v675 = vpack.c.bf16 %v475, %v474
  %v676 = vpack.c.bf16 %v477, %v476
  %v677 = vld [vmem:[%s7] sm:$0xf]
  %v678 = vld [vmem:[%s7 + $0x4] sm:$0xf]
  %v679 = vld [vmem:[%s7 + $0x8] sm:$0xf]
  %v680 = vld [vmem:[%s7 + $0xc] sm:$0xf]
  %v685 = vunpack.c.l.b16 %v677
  %v686 = vunpack.c.l.b16 %v678
  %v687 = vunpack.c.l.b16 %v679
  %v688 = vunpack.c.l.b16 %v680
  %v689 = vpack.c.b16 %v686, %v685
  %v690 = vpack.c.b16 %v688, %v687
  %v694 = vsel %vm506, %v673, 0
  %v697 = vsel %vm506, %v674, 0
  %v700 = vsel %vm506, %v675, 0
  %v703 = vsel %vm506, %v676, 0
  %705 = vmatprep.subr.bf16.mxu0 0
  %706 = vmatpush1.bf16.msra.mxu0 %v689
  %707 = vmatprep.subr.bf16.mxu0 0
  %708 = vmatpush1.bf16.msra.mxu0 %v690
  %709 = vmatprep.subr.bf16.mxu0 0
  %710 = vmatpush1.bf16.msra.mxu0 0
  %711 = vmatprep.subr.bf16.mxu0 0
  %712 = vmatpush1.bf16.msra.mxu0 0
  %713 = vmatprep.subr.bf16.mxu0 0
  %714 = vmatpush1.bf16.msra.mxu0 0
  %715 = vmatprep.subr.bf16.mxu0 0
  %716 = vmatpush1.bf16.msra.mxu0 0
  %717 = vmatprep.subr.bf16.mxu0 0
  %718 = vmatpush1.bf16.msra.mxu0 0
  %719 = vmatprep.subr.bf16.mxu0 0
  %720 = vmatpush1.bf16.msra.mxu0 0
  %721 = vmatprep.subr.bf16.mxu0 0
  %722 = vmatpush1.bf16.msra.mxu0 0
  %723 = vmatprep.subr.bf16.mxu0 0
  %724 = vmatpush1.bf16.msra.mxu0 0
  %725 = vmatprep.subr.bf16.mxu0 0
  %726 = vmatpush1.bf16.msra.mxu0 0
  %727 = vmatprep.subr.bf16.mxu0 0
  %728 = vmatpush1.bf16.msra.mxu0 0
  %729 = vmatprep.subr.bf16.mxu0 0
  %730 = vmatpush1.bf16.msra.mxu0 0
  %731 = vmatprep.subr.bf16.mxu0 0
  %732 = vmatpush1.bf16.msra.mxu0 0
  %733 = vmatprep.subr.bf16.mxu0 0
  %734 = vmatpush1.bf16.msra.mxu0 0
  %735 = vmatprep.subr.bf16.mxu0 0
  %736 = vmatpush1.bf16.msra.mxu0 0
  %737 = vmatprep.mubr.bf16.mxu0 0
  %738 = vmatmul.mubr.bf16.gmra.mrb[0].mxu0 %v694
  %v739 = vpop.f32.mrb[0].mxu0
  %v740 = vadd.f32 0.0, %v739
  %v741 = vpop.f32.mrb[0].mxu0
  %v742 = vpop.f32.mrb[0].mxu0
  %v743 = vadd.f32 0.0, %v742
  %v744 = vpop.f32.mrb[0].mxu0
  %745 = vmatprep.mubr.bf16.mxu0 0
  %746 = vmatmul.mubr.bf16.gmra.mrb[0].mxu0 %v697
  %v747 = vpop.f32.mrb[0].mxu0
  %v748 = vadd.f32 0.0, %v747
  %v749 = vpop.f32.mrb[0].mxu0
  %v750 = vpop.f32.mrb[0].mxu0
  %v751 = vadd.f32 0.0, %v750
  %v752 = vpop.f32.mrb[0].mxu0
  %753 = vmatprep.mubr.bf16.mxu0 0
  %754 = vmatmul.mubr.bf16.gmra.mrb[0].mxu0 %v700
  %v755 = vpop.f32.mrb[0].mxu0
  %v756 = vadd.f32 0.0, %v755
  %v757 = vpop.f32.mrb[0].mxu0
  %v758 = vpop.f32.mrb[0].mxu0
  %v759 = vadd.f32 0.0, %v758
  %v760 = vpop.f32.mrb[0].mxu0
  %761 = vmatprep.mubr.bf16.mxu0 0
  %762 = vmatmul.mubr.bf16.gmra.mrb[0].mxu0 %v703
  %v763 = vpop.f32.mrb[0].mxu0
  %v764 = vadd.f32 0.0, %v763
  %v765 = vpop.f32.mrb[0].mxu0
  %v766 = vpop.f32.mrb[0].mxu0
  %v767 = vadd.f32 0.0, %v766
  %v768 = vpop.f32.mrb[0].mxu0
  %769 = vdwg.mxu0
  %v770 = vadd.f32 %v643, %v740
  %v771 = vadd.f32 %v646, %v743
  %v772 = vadd.f32 %v651, %v748
  %v773 = vadd.f32 %v654, %v751
  %v774 = vadd.f32 %v659, %v756
  %v775 = vadd.f32 %v662, %v759
  %v776 = vadd.f32 %v667, %v764
  %v777 = vadd.f32 %v670, %v767
  %v778 = vld [vmem:[%s8] sm:$0x1]
  %v780 = vlaneseq
  %v781 = vshrl.u32 %v780, 7
  %v782 = vsub.s32 0, %v781
  %v783 = vrot.slane %v778, %v782
  %v785 = vadd.f32 %v770, %v783
  %v786 = vadd.f32 %v771, %v783
  %v787 = vadd.f32 %v772, %v783
  %v788 = vadd.f32 %v773, %v783
  %v789 = vadd.f32 %v774, %v783
  %v790 = vadd.f32 %v775, %v783
  %v791 = vadd.f32 %v776, %v783
  %v792 = vadd.f32 %v777, %v783
  %v793 = vadd.f32 %v245, %v785
  %v794 = vadd.f32 %v248, %v786
  %v795 = vadd.f32 %v253, %v787
  %v796 = vadd.f32 %v256, %v788
  %v797 = vadd.f32 %v261, %v789
  %v798 = vadd.f32 %v264, %v790
  %v799 = vadd.f32 %v269, %v791
  %v800 = vadd.f32 %v272, %v792
  %801 = vst.msk [vmem:[%s9] sm:$0xff] %vm506, %v793
  %802 = vst.msk [vmem:[%s9 + $0x8] sm:$0xff] %vm506, %v794
  %803 = vst.msk [vmem:[%s9 + $0x10] sm:$0xff] %vm506, %v795
  %804 = vst.msk [vmem:[%s9 + $0x18] sm:$0xff] %vm506, %v796
  %805 = vst.msk [vmem:[%s9 + $0x20] sm:$0xff] %vm506, %v797
  %806 = vst.msk [vmem:[%s9 + $0x28] sm:$0xff] %vm506, %v798
  %807 = vst.msk [vmem:[%s9 + $0x30] sm:$0xff] %vm506, %v799
  %808 = vst.msk [vmem:[%s9 + $0x38] sm:$0xff] %vm506, %v800
  // Predicated region
  $region38: #{tpu_custom_call.1} parent=0 // pred_check
    _
  $region39: #{tpu_custom_call.1} parent=0 // pred_check_branch
    %810 = sbr.rel (0) target = $region41
  $region40: #{tpu_custom_call.1} parent=0 // pred_region
    _
  $region41: #{tpu_custom_call.1} parent=0 // pred_fallthru
    _
  // Predicated region
  $region42: #{tpu_custom_call.1} parent=0 // pred_check
    _
  $region43: #{tpu_custom_call.1} parent=0 // pred_check_branch
    %812 = sbr.rel (0) target = $region45
  $region44: #{tpu_custom_call.1} parent=0 // pred_region
    _
  $region45: #{tpu_custom_call.1} parent=0 // pred_fallthru
    _

</llo_original>
